<compile_context>
chip_gen: v7x
topology: tpu7x:2x2x1
jax: 0.10.0
libtpu: 0.0.40
codegen_flags: <defaults>
</compile_context>

<pallas_src>
import functools

import jax
import jax.numpy as jnp
from jax.experimental import pallas as pl
from jax.experimental.pallas import tpu as pltpu


def _round_up(a: int, b: int) -> int:
    return (a + b - 1) // b * b


# --------------------------------------------------------------------------
# Kernel: for grid point (i, k) compute the contribution of hidden slice k to
# output row-tile i.  ReLU is elementwise, so it can be applied per H-chunk.
# --------------------------------------------------------------------------
def ffn_kernel(x_ref, w1_ref, b1_ref, w2_ref, b2_ref, o_ref, acc_ref):
    k = pl.program_id(1)

    @pl.when(k == 0)
    def _init():
        acc_ref[...] = jnp.zeros_like(acc_ref)

    h = jnp.dot(x_ref[...], w1_ref[...], preferred_element_type=jnp.float32)
    h = jnp.maximum(h + b1_ref[...], 0.0)
    acc_ref[...] += jnp.dot(h.astype(w2_ref.dtype), w2_ref[...],
                            preferred_element_type=jnp.float32)

    @pl.when(k == pl.num_programs(1) - 1)
    def _finalize():
        o_ref[...] = (acc_ref[...] + b2_ref[...]).astype(o_ref.dtype)


# --------------------------------------------------------------------------
# Tile selection from a VMEM budget.
# --------------------------------------------------------------------------
_ROW_TILE_CANDIDATES = (512, 256, 128, 64, 32, 16, 8)
_K_TILE_CANDIDATES = (1024, 512, 256, 128)
_VMEM_BUDGET_BYTES = 32 * 1024 * 1024  # fits default scoped VMEM on v5e/v6e/v7x


def _vmem_usage(rt, tk, cp, in_bytes, out_bytes):
    return (2 * rt * cp * in_bytes      # x tile (double-buffered)
            + 2 * rt * cp * out_bytes   # out tile (double-buffered)
            + rt * cp * 4               # f32 accumulator scratch
            + 2 * cp * tk * in_bytes    # W1 slice (double-buffered, streams)
            + 2 * tk * cp * in_bytes    # W2 slice (double-buffered, streams)
            + 2 * tk * 4 + 2 * cp * 4)  # b1 slice / b2 (f32, tiny)


def _choose_tiles(m, cp, hp, in_bytes, out_bytes, row_tile, k_tile):
    if row_tile is not None:
        rts = (max(8, _round_up(row_tile, 8)),)
    else:
        # Keep >= 2 row tiles when possible so v7x's two TensorCores both work.
        cap = max(8, _round_up(pl.cdiv(m, 2), 8)) if m > 8 else 8
        rts = tuple(dict.fromkeys(min(rt, cap) for rt in _ROW_TILE_CANDIDATES))
    if k_tile is not None:
        tks = (min(hp, max(128, _round_up(k_tile, 128))),)
    else:
        tks = tuple(dict.fromkeys(min(tk, hp) for tk in _K_TILE_CANDIDATES))
    for rt in rts:
        for tk in tks:
            if _vmem_usage(rt, tk, cp, in_bytes, out_bytes) <= _VMEM_BUDGET_BYTES:
                return rt, tk
    return min(rts), min(tks)


# --------------------------------------------------------------------------
# Wrapper: pad to lane/sublane-friendly shapes, build grid, call the kernel.
# --------------------------------------------------------------------------
@functools.partial(jax.jit, static_argnames=("row_tile", "k_tile", "compute_dtype"))
def feed_forward(x, w1, b1, w2, b2, *, row_tile=None, k_tile=None,
                 compute_dtype=None):
    """x: (B, T, C); w1: (C, 4C); b1: (1, 4C); w2: (4C, C); b2: (1, C)."""
    orig_dtype = x.dtype
    B, T, C = x.shape
    H = w1.shape[1]
    M = B * T

    cdt = jnp.dtype(compute_dtype) if compute_dtype is not None else jnp.dtype(orig_dtype)
    in_bytes = cdt.itemsize
    out_bytes = jnp.dtype(orig_dtype).itemsize

    # Lane-dense padding targets.
    Cp = _round_up(C, 128)
    Hp0 = _round_up(H, 128)
    rt, tk = _choose_tiles(M, Cp, Hp0, in_bytes, out_bytes, row_tile, k_tile)
    Hp = _round_up(Hp0, tk)           # no partial K tiles
    Mp = _round_up(M, rt)             # no partial row tiles

    b1 = b1.reshape(1, -1)
    b2 = b2.reshape(1, -1)

    # Zero padding: padded rows/cols contribute exact zeros and are sliced off.
    x2 = jnp.zeros((Mp, Cp), cdt).at[:M, :C].set(x.reshape(M, C).astype(cdt))
    w1p = jnp.zeros((Cp, Hp), cdt).at[:C, :H].set(w1.astype(cdt))
    w2p = jnp.zeros((Hp, Cp), cdt).at[:H, :C].set(w2.astype(cdt))
    b1p = jnp.zeros((1, Hp), jnp.float32).at[:, :H].set(b1.astype(jnp.float32))
    b2p = jnp.zeros((1, Cp), jnp.float32).at[:, :C].set(b2.astype(jnp.float32))

    grid = (Mp // rt, Hp // tk)

    flops = 2 * Mp * Cp * Hp + 2 * Mp * Hp * Cp
    bytes_accessed = (x2.size * in_bytes + w1p.size * in_bytes
                      + w2p.size * in_bytes + b1p.size * 4 + b2p.size * 4
                      + Mp * Cp * out_bytes)
    vmem_limit = min(
        max(_vmem_usage(rt, tk, Cp, in_bytes, out_bytes) + (2 << 20), 32 << 20),
        48 << 20)

    out2 = pl.pallas_call(
        ffn_kernel,
        out_shape=jax.ShapeDtypeStruct((Mp, Cp), orig_dtype),
        grid_spec=pltpu.PrefetchScalarGridSpec(
            num_scalar_prefetch=0,
            grid=grid,
            in_specs=[
                pl.BlockSpec((rt, Cp), lambda i, k: (i, 0)),   # x rows (resident over k)
                pl.BlockSpec((Cp, tk), lambda i, k: (0, k)),   # W1 H-slice (streams)
                pl.BlockSpec((1, tk), lambda i, k: (0, k)),    # b1 H-slice
                pl.BlockSpec((tk, Cp), lambda i, k: (k, 0)),   # W2 H-slice (streams)
                pl.BlockSpec((1, Cp), lambda i, k: (0, 0)),    # b2 (constant)
            ],
            out_specs=pl.BlockSpec((rt, Cp), lambda i, k: (i, 0)),
            scratch_shapes=[pltpu.VMEM((rt, Cp), jnp.float32)],
        ),
        compiler_params=pltpu.CompilerParams(
            dimension_semantics=("parallel", "arbitrary"),
            vmem_limit_bytes=int(vmem_limit)),
        cost_estimate=pl.CostEstimate(flops=int(flops), transcendentals=0,
                                      bytes_accessed=int(bytes_accessed)),
    )(x2, w1p, b1p, w2p, b2p)

    return out2[:M, :C].reshape(B, T, C)


if __name__ == "__main__":
    # Small shapes consistent with the module: n_embd=32, hidden=4*n_embd.
    B, T, n_embd = 2, 8, 32
    hidden = 4 * n_embd  # 128

    key = jax.random.PRNGKey(0)
    kx, k1, kb1, k2, kb2 = jax.random.split(key, 5)

    x = jax.random.normal(kx, (B, T, n_embd), dtype=jnp.float32)
    # Deterministic synthetic params (PyTorch-like uniform init scale).
    lim1 = 1.0 / jnp.sqrt(n_embd)
    lim2 = 1.0 / jnp.sqrt(hidden)
    w1 = jax.random.uniform(k1, (n_embd, hidden), jnp.float32, -lim1, lim1)
    b1 = jax.random.uniform(kb1, (1, hidden), jnp.float32, -lim1, lim1)
    w2 = jax.random.uniform(k2, (hidden, n_embd), jnp.float32, -lim2, lim2)
    b2 = jax.random.uniform(kb2, (1, n_embd), jnp.float32, -lim2, lim2)

    # Pure-JAX reference.
    ref = jnp.maximum(x.reshape(-1, n_embd) @ w1 + b1, 0.0) @ w2 + b2
    ref = ref.reshape(B, T, n_embd)

    # f32 path.
    out = jax.block_until_ready(feed_forward(x, w1, b1, w2, b2))
    assert out.shape == (B, T, n_embd)
    assert jnp.allclose(out, ref, atol=2e-5, rtol=2e-5), float(
        jnp.max(jnp.abs(out - ref)))

    # bf16 MXU path (f32 accumulation) — looser tolerance.
    out_bf16 = jax.block_until_ready(
        feed_forward(x, w1, b1, w2, b2, compute_dtype=jnp.bfloat16))
    assert out_bf16.shape == (B, T, n_embd)
    assert jnp.allclose(out_bf16, ref, atol=1e-1, rtol=1e-1), float(
        jnp.max(jnp.abs(out_bf16 - ref)))

    print("KERNEL_OK")
</pallas_src>

<mosaic_0001>
module attributes {stable_mosaic.version = 11 : i64} {
  func.func @ffn_kernel(%arg0: i32, %arg1: i32, %arg2: memref<8x128xf32, #tpu.memory_space<vmem>>, %arg3: memref<128x128xf32, #tpu.memory_space<vmem>>, %arg4: memref<1x128xf32, #tpu.memory_space<vmem>>, %arg5: memref<128x128xf32, #tpu.memory_space<vmem>>, %arg6: memref<1x128xf32, #tpu.memory_space<vmem>>, %arg7: memref<8x128xf32, #tpu.memory_space<vmem>>, %arg8: memref<8x128xf32, #tpu.memory_space<vmem>>) attributes {dimension_semantics = [#tpu.dimension_semantics<parallel>, #tpu.dimension_semantics<arbitrary>], iteration_bounds = array<i64: 2, 1>, scalar_prefetch = 0 : i64, scratch_operands = 1 : i64, tpu.core_type = #tpu.core_type<tc>, window_params = [{transform_indices = @transform_0, window_bounds = array<i64: 8, 128>}, {transform_indices = @transform_1, window_bounds = array<i64: 128, 128>}, {transform_indices = @transform_2, window_bounds = array<i64: 1, 128>}, {transform_indices = @transform_3, window_bounds = array<i64: 128, 128>}, {pipeline_mode = #tpu.pipeline_mode<synchronous>, transform_indices = @transform_4, window_bounds = array<i64: 1, 128>}, {transform_indices = @transform_5, window_bounds = array<i64: 8, 128>}]} {
    %c0_i32 = arith.constant 0 : i32
    %0 = arith.cmpi eq, %arg1, %c0_i32 : i32
    %1 = arith.extui %0 : i1 to i32
    %c0_i32_0 = arith.constant 0 : i32
    %2 = arith.cmpi ne, %1, %c0_i32_0 : i32
    scf.if %2 {
      %cst_16 = arith.constant 0.000000e+00 : f32
      %19 = vector.broadcast %cst_16 : f32 to vector<8x128xf32>
      %c0_17 = arith.constant 0 : index
      %c0_18 = arith.constant 0 : index
      %20 = vector.load %arg8[%c0_17, %c0_18] : memref<8x128xf32, #tpu.memory_space<vmem>>, vector<8x128xf32>
      tpu.vector_store %arg8[%c0_17, %c0_18], %19 {strides = array<i32>} : memref<8x128xf32, #tpu.memory_space<vmem>>, vector<8x128xf32>,
    } else {
    }
    %c0 = arith.constant 0 : index
    %c0_1 = arith.constant 0 : index
    %3 = vector.load %arg2[%c0, %c0_1] : memref<8x128xf32, #tpu.memory_space<vmem>>, vector<8x128xf32>
    %c0_2 = arith.constant 0 : index
    %c0_3 = arith.constant 0 : index
    %4 = vector.load %arg3[%c0_2, %c0_3] : memref<128x128xf32, #tpu.memory_space<vmem>>, vector<128x128xf32>
    %cst = arith.constant dense<0.000000e+00> : vector<8x128xf32>
    %5 = tpu.matmul %3, %4, %cst {dimension_numbers = #tpu.dot_dimension_numbers<[1], [0], [0], [1], [0, 0, 1, 1], [], []>} : vector<8x128xf32>, vector<128x128xf32>, vector<8x128xf32> -> vector<8x128xf32>
    %c0_4 = arith.constant 0 : index
    %c0_5 = arith.constant 0 : index
    %6 = vector.load %arg4[%c0_4, %c0_5] : memref<1x128xf32, #tpu.memory_space<vmem>>, vector<1x128xf32>
    %7 = vector.broadcast %6 : vector<1x128xf32> to vector<8x128xf32>
    %8 = arith.addf %5, %7 : vector<8x128xf32>
    %cst_6 = arith.constant 0.000000e+00 : f32
    %9 = vector.broadcast %cst_6 : f32 to vector<8x128xf32>
    %10 = arith.maximumf %8, %9 : vector<8x128xf32>
    %c0_7 = arith.constant 0 : index
    %c0_8 = arith.constant 0 : index
    %11 = vector.load %arg8[%c0_7, %c0_8] : memref<8x128xf32, #tpu.memory_space<vmem>>, vector<8x128xf32>
    %c0_9 = arith.constant 0 : index
    %c0_10 = arith.constant 0 : index
    %12 = vector.load %arg5[%c0_9, %c0_10] : memref<128x128xf32, #tpu.memory_space<vmem>>, vector<128x128xf32>
    %cst_11 = arith.constant dense<0.000000e+00> : vector<8x128xf32>
    %13 = tpu.matmul %10, %12, %cst_11 {dimension_numbers = #tpu.dot_dimension_numbers<[1], [0], [0], [1], [0, 0, 1, 1], [], []>} : vector<8x128xf32>, vector<128x128xf32>, vector<8x128xf32> -> vector<8x128xf32>
    %14 = arith.addf %11, %13 : vector<8x128xf32>
    %c0_12 = arith.constant 0 : index
    %c0_13 = arith.constant 0 : index
    %15 = vector.load %arg8[%c0_12, %c0_13] : memref<8x128xf32, #tpu.memory_space<vmem>>, vector<8x128xf32>
    tpu.vector_store %arg8[%c0_12, %c0_13], %14 {strides = array<i32>} : memref<8x128xf32, #tpu.memory_space<vmem>>, vector<8x128xf32>,
    %c0_i32_14 = arith.constant 0 : i32
    %16 = arith.cmpi eq, %arg1, %c0_i32_14 : i32
    %17 = arith.extui %16 : i1 to i32
    %c0_i32_15 = arith.constant 0 : i32
    %18 = arith.cmpi ne, %17, %c0_i32_15 : i32
    scf.if %18 {
      %c0_16 = arith.constant 0 : index
      %c0_17 = arith.constant 0 : index
      %19 = vector.load %arg8[%c0_16, %c0_17] : memref<8x128xf32, #tpu.memory_space<vmem>>, vector<8x128xf32>
      %c0_18 = arith.constant 0 : index
      %c0_19 = arith.constant 0 : index
      %20 = vector.load %arg6[%c0_18, %c0_19] : memref<1x128xf32, #tpu.memory_space<vmem>>, vector<1x128xf32>
      %21 = vector.broadcast %20 : vector<1x128xf32> to vector<8x128xf32>
      %22 = arith.addf %19, %21 : vector<8x128xf32>
      %c0_20 = arith.constant 0 : index
      %c0_21 = arith.constant 0 : index
      %23 = vector.load %arg7[%c0_20, %c0_21] : memref<8x128xf32, #tpu.memory_space<vmem>>, vector<8x128xf32>
      tpu.vector_store %arg7[%c0_20, %c0_21], %22 {strides = array<i32>} : memref<8x128xf32, #tpu.memory_space<vmem>>, vector<8x128xf32>,
    } else {
    }
    return
  }
  func.func @transform_0(%arg0: i32, %arg1: i32) -> (i32, i32) {
    %c0_i32 = arith.constant 0 : i32
    %c0_i32_0 = arith.constant 0 : i32
    return %arg0, %c0_i32 : i32, i32
  }
  func.func @transform_1(%arg0: i32, %arg1: i32) -> (i32, i32) {
    %c0_i32 = arith.constant 0 : i32
    %c0_i32_0 = arith.constant 0 : i32
    return %c0_i32, %arg1 : i32, i32
  }
  func.func @transform_2(%arg0: i32, %arg1: i32) -> (i32, i32) {
    %c0_i32 = arith.constant 0 : i32
    %c0_i32_0 = arith.constant 0 : i32
    return %c0_i32, %arg1 : i32, i32
  }
  func.func @transform_3(%arg0: i32, %arg1: i32) -> (i32, i32) {
    %c0_i32 = arith.constant 0 : i32
    %c0_i32_0 = arith.constant 0 : i32
    return %arg1, %c0_i32 : i32, i32
  }
  func.func @transform_4(%arg0: i32, %arg1: i32) -> (i32, i32) {
    %c0_i32 = arith.constant 0 : i32
    %c0_i32_0 = arith.constant 0 : i32
    %c0_i32_1 = arith.constant 0 : i32
    return %c0_i32, %c0_i32_0 : i32, i32
  }
  func.func @transform_5(%arg0: i32, %arg1: i32) -> (i32, i32) {
    %c0_i32 = arith.constant 0 : i32
    %c0_i32_0 = arith.constant 0 : i32
    return %arg0, %c0_i32 : i32, i32
  }
}

</mosaic_0001>

<llo_original>
// kernel: feed_forward.1
$region0: #{feed_forward.1}
  #allocation0 [shape = 'u32[]', space=smem, size = 0x4, offset = 0x4, fixed_abs, tag = 'smem constant byte address 0x4 - core index']
  #allocation1 [shape = 'u32[144,128]{1,0:T(1,128)}', space=vmem, size = 0x12000, scoped, tag = 'internal scratch']
  #allocation2 [shape = 'f32[8,128]{1,0:T(8,128)}', space=vmem, size = 0x1000, scoped, tag = 'scratch operand']
  %s0 = inlined_call_operand.vmem [shape: f32[16,128], index: 0, kind: input, shape index: {}]
  %s1 = inlined_call_operand.vmem [shape: f32[128,128], index: 1, kind: input, shape index: {}]
  %s2 = inlined_call_operand.vmem [shape: f32[1,128], index: 2, kind: input, shape index: {}]
  %s3 = inlined_call_operand.vmem [shape: f32[128,128], index: 3, kind: input, shape index: {}]
  %s4 = inlined_call_operand.vmem [shape: f32[1,128], index: 4, kind: input, shape index: {}]
  %s5 = inlined_call_operand.vmem [shape: f32[16,128], index: 5, kind: output, shape index: {}]
  %s6 = sld [smem:[#allocation0]]
  $region61: #{feed_forward.1} parent=0
    _
  %s8 = ssub.s32 1, %s6
  %s9 = scalar_select 0, %s8, %s6
  loop: start=0, step=1, limit=4
  $region2: #{feed_forward.1} parent=0 // loop_pre_header
    _
  $region3: #{feed_forward.1} parent=0 // loop_header
    %s11 = sphi 0, %s15
    %p12 = scmp.ge.s32.totalorder %s11, 4
    %s18 = sphi 0, %s30
    %s19 = sphi 0, %s26
    %s20 = sphi 0, %s18
    %s21 = sphi 0, %s19
    %s22 = sphi 0, %s20
    %s23 = sphi 0, %s21
    %s33 = sphi 0, %s35
    %s36 = sphi 0, %s33
    %s37 = sphi 0, %s36
    %s53 = sphi 0, %s37
    %s59 = sphi 0, %s61
    %s62 = sphi 0, %s59
    %s63 = sphi 0, %s62
    %s79 = sphi 0, %s63
    %s85 = sphi 0, %s87
    %s88 = sphi 0, %s85
    %s89 = sphi 0, %s88
    %s105 = sphi 0, %s89
    %s111 = sphi 0, %s113
    %s114 = sphi 0, %s111
    %s115 = sphi 0, %s114
    %s131 = sphi 0, %s115
    %s135 = sphi 0, %s135
    %s137 = sphi 0, %s135
    %s138 = sphi 0, %s137
    %s152 = sphi 0, %s138
    %s158 = sphi 0, %s160
    %s161 = sphi 0, %s158
    %s162 = sphi 0, %s161
    %s178 = sphi 0, %s162
  $region4: #{feed_forward.1} parent=0 // loop_header_branch
    %14 = sbr.rel (%p12) target = $region8
  $region5: #{feed_forward.1} parent=0 // loop_body
    %s16 = ssub.s32 %s11, 1
    %s17 = ssub.s32 %s11, 2
    %s24 = sadd.s32 1, %s19
    %p25 = scmp.ge.s32.totalorder %s24, 1
    %s26 = scalar_select %p25, 0, %s24
    %s27 = sadd.s32 1, %s18
    %s28 = scalar_select %p25, %s27, %s18
    %p29 = scmp.ge.s32.totalorder %s28, 2
    %s30 = scalar_select %p29, 0, %s28
    %s31 = ssub.s32 %s18, %s30
    %p32 = scmp.eq.s32.totalorder %s31, 0
    %s34 = sadd.s32 %s33, 1
    %s35 = scalar_select %p32, %s33, %s34
    %p38 = pneg %p32
    %p39 = scmp.eq.s32.totalorder %s11, 1
    %p40 = por %p38, %p39
    %p41 = scmp.ne.s32.totalorder %s33, %s36
    %p42 = scmp.eq.s32.totalorder %s11, 0
    %p43 = por %p41, %p42
    %p44 = scmp.ne.s32.totalorder %s33, %s36
    %p45 = scmp.eq.s32.totalorder %s16, 1
    %p46 = por %p44, %p45
    %p47 = scmp.ne.s32.totalorder %s36, %s37
    %p48 = scmp.eq.s32.totalorder %s16, 0
    %p49 = por %p47, %p48
    %p50 = scmp.ne.s32.totalorder %s36, %s37
    %p51 = scmp.eq.s32.totalorder %s17, 1
    %p52 = por %p50, %p51
    %p54 = scmp.ne.s32.totalorder %s37, %s53
    %p55 = scmp.eq.s32.totalorder %s17, 0
    %p56 = por %p54, %p55
    %s57 = ssub.s32 %s19, %s26
    %p58 = scmp.eq.s32.totalorder %s57, 0
    %s60 = sadd.s32 %s59, 1
    %s61 = scalar_select %p58, %s59, %s60
    %p64 = pneg %p58
    %p65 = scmp.eq.s32.totalorder %s11, 1
    %p66 = por %p64, %p65
    %p67 = scmp.ne.s32.totalorder %s59, %s62
    %p68 = scmp.eq.s32.totalorder %s11, 0
    %p69 = por %p67, %p68
    %p70 = scmp.ne.s32.totalorder %s59, %s62
    %p71 = scmp.eq.s32.totalorder %s16, 1
    %p72 = por %p70, %p71
    %p73 = scmp.ne.s32.totalorder %s62, %s63
    %p74 = scmp.eq.s32.totalorder %s16, 0
    %p75 = por %p73, %p74
    %p76 = scmp.ne.s32.totalorder %s62, %s63
    %p77 = scmp.eq.s32.totalorder %s17, 1
    %p78 = por %p76, %p77
    %p80 = scmp.ne.s32.totalorder %s63, %s79
    %p81 = scmp.eq.s32.totalorder %s17, 0
    %p82 = por %p80, %p81
    %s83 = ssub.s32 %s19, %s26
    %p84 = scmp.eq.s32.totalorder %s83, 0
    %s86 = sadd.s32 %s85, 1
    %s87 = scalar_select %p84, %s85, %s86
    %p90 = pneg %p84
    %p91 = scmp.eq.s32.totalorder %s11, 1
    %p92 = por %p90, %p91
    %p93 = scmp.ne.s32.totalorder %s85, %s88
    %p94 = scmp.eq.s32.totalorder %s11, 0
    %p95 = por %p93, %p94
    %p96 = scmp.ne.s32.totalorder %s85, %s88
    %p97 = scmp.eq.s32.totalorder %s16, 1
    %p98 = por %p96, %p97
    %p99 = scmp.ne.s32.totalorder %s88, %s89
    %p100 = scmp.eq.s32.totalorder %s16, 0
    %p101 = por %p99, %p100
    %p102 = scmp.ne.s32.totalorder %s88, %s89
    %p103 = scmp.eq.s32.totalorder %s17, 1
    %p104 = por %p102, %p103
    %p106 = scmp.ne.s32.totalorder %s89, %s105
    %p107 = scmp.eq.s32.totalorder %s17, 0
    %p108 = por %p106, %p107
    %s109 = ssub.s32 %s19, %s26
    %p110 = scmp.eq.s32.totalorder %s109, 0
    %s112 = sadd.s32 %s111, 1
    %s113 = scalar_select %p110, %s111, %s112
    %p116 = pneg %p110
    %p117 = scmp.eq.s32.totalorder %s11, 1
    %p118 = por %p116, %p117
    %p119 = scmp.ne.s32.totalorder %s111, %s114
    %p120 = scmp.eq.s32.totalorder %s11, 0
    %p121 = por %p119, %p120
    %p122 = scmp.ne.s32.totalorder %s111, %s114
    %p123 = scmp.eq.s32.totalorder %s16, 1
    %p124 = por %p122, %p123
    %p125 = scmp.ne.s32.totalorder %s114, %s115
    %p126 = scmp.eq.s32.totalorder %s16, 0
    %p127 = por %p125, %p126
    %p128 = scmp.ne.s32.totalorder %s114, %s115
    %p129 = scmp.eq.s32.totalorder %s17, 1
    %p130 = por %p128, %p129
    %p132 = scmp.ne.s32.totalorder %s115, %s131
    %p133 = scmp.eq.s32.totalorder %s17, 0
    %p134 = por %p132, %p133
    %s136 = sadd.s32 %s135, 1
    %p139 = scmp.eq.s32.totalorder %s11, 1
    %p140 = scmp.ne.s32.totalorder %s135, %s137
    %p141 = scmp.eq.s32.totalorder %s11, 0
    %p142 = por %p140, %p141
    %p143 = scmp.ne.s32.totalorder %s135, %s137
    %p144 = scmp.eq.s32.totalorder %s16, 1
    %p145 = por %p143, %p144
    %p146 = scmp.ne.s32.totalorder %s137, %s138
    %p147 = scmp.eq.s32.totalorder %s16, 0
    %p148 = por %p146, %p147
    %p149 = scmp.ne.s32.totalorder %s137, %s138
    %p150 = scmp.eq.s32.totalorder %s17, 1
    %p151 = por %p149, %p150
    %p153 = scmp.ne.s32.totalorder %s138, %s152
    %p154 = scmp.eq.s32.totalorder %s17, 0
    %p155 = por %p153, %p154
    %s156 = ssub.s32 %s18, %s30
    %p157 = scmp.eq.s32.totalorder %s156, 0
    %s159 = sadd.s32 %s158, 1
    %s160 = scalar_select %p157, %s158, %s159
    %p163 = pneg %p157
    %p164 = scmp.eq.s32.totalorder %s11, 1
    %p165 = por %p163, %p164
    %p166 = scmp.ne.s32.totalorder %s158, %s161
    %p167 = scmp.eq.s32.totalorder %s11, 0
    %p168 = por %p166, %p167
    %p169 = scmp.ne.s32.totalorder %s158, %s161
    %p170 = scmp.eq.s32.totalorder %s16, 1
    %p171 = por %p169, %p170
    %p172 = scmp.ne.s32.totalorder %s161, %s162
    %p173 = scmp.eq.s32.totalorder %s16, 0
    %p174 = por %p172, %p173
    %p175 = scmp.ne.s32.totalorder %s161, %s162
    %p176 = scmp.eq.s32.totalorder %s17, 1
    %p177 = por %p175, %p176
    %p179 = scmp.ne.s32.totalorder %s162, %s178
    %p180 = scmp.eq.s32.totalorder %s17, 0
    %p181 = por %p179, %p180
    %p182 = scmp.le.s32.totalorder 1, %s11
    %p183 = scmp.lt.s32.totalorder %s11, 3
    %p184 = pnand %p182, %p183
    %p185 = pneg %p184
    // Predicated region
    $region9: #{feed_forward.1} parent=5 // pred_check
      _
    $region10: #{feed_forward.1} parent=5 // pred_check_branch
      %187 = sbr.rel (%p184) target = $region12
    $region11: #{feed_forward.1} parent=5 // pred_region
      %s188 = ssub.s32 %s11, 1
      // Predicated region
      $region13: #{feed_forward.1} parent=11 // pred_check
        %p189 = pneg %p75
      $region14: #{feed_forward.1} parent=11 // pred_check_branch
        %191 = sbr.rel (%p189) target = $region16
      $region15: #{feed_forward.1} parent=11 // pred_region
        %p192 = scmp.lt.s32.totalorder %s21, 0
        %s193 = scalar_select %p192, %s21, 0
        %s194 = smul.addr %s193, 8
        %s195 = scalar_lea.vmem %s1, %s194
      $region16: #{feed_forward.1} parent=11 // pred_fallthru
        _
      // Predicated region
      $region17: #{feed_forward.1} parent=11 // pred_check
        %p196 = pneg %p101
      $region18: #{feed_forward.1} parent=11 // pred_check_branch
        %198 = sbr.rel (%p196) target = $region20
      $region19: #{feed_forward.1} parent=11 // pred_region
        %p199 = scmp.lt.s32.totalorder %s21, 0
        %s200 = scalar_select %p199, %s21, 0
        %s201 = scalar_lea.vmem %s2, %s200
      $region20: #{feed_forward.1} parent=11 // pred_fallthru
        _
      // Predicated region
      $region21: #{feed_forward.1} parent=11 // pred_check
        %p202 = pneg %p127
      $region22: #{feed_forward.1} parent=11 // pred_check_branch
        %204 = sbr.rel (%p202) target = $region24
      $region23: #{feed_forward.1} parent=11 // pred_region
        %s205 = smul.u32 16, %s21
        %p206 = scmp.lt.s32.totalorder %s205, 15
        %s207 = scalar_select %p206, %s205, 15
        %s208 = smul.addr %s207, 8
        %s209 = scalar_lea.vmem %s3, %s208
        %s210 = smul.u32 16, %s21
      $region24: #{feed_forward.1} parent=11 // pred_fallthru
        _
      // Predicated region
      $region25: #{feed_forward.1} parent=11 // pred_check
        %p211 = pneg %p148
      $region26: #{feed_forward.1} parent=11 // pred_check_branch
        %213 = sbr.rel (%p211) target = $region28
      $region27: #{feed_forward.1} parent=11 // pred_region
        _
      $region28: #{feed_forward.1} parent=11 // pred_fallthru
        _
    $region12: #{feed_forward.1} parent=5 // pred_fallthru
      _
    %p214 = scmp.lt.s32.totalorder %s11, 2
    // Predicated region
    $region29: #{feed_forward.1} parent=5 // pred_check
      %p215 = pneg %p214
    $region30: #{feed_forward.1} parent=5 // pred_check_branch
      %217 = sbr.rel (%p215) target = $region32
    $region31: #{feed_forward.1} parent=5 // pred_region
      // Predicated region
      $region33: #{feed_forward.1} parent=31 // pred_check
        %p218 = pneg %p43
      $region34: #{feed_forward.1} parent=31 // pred_check_branch
        %220 = sbr.rel (%p218) target = $region36
      $region35: #{feed_forward.1} parent=31 // pred_region
        %p221 = scmp.lt.s32.totalorder %s18, 1
        %s222 = scalar_select %p221, %s18, 1
        %s223 = smul.addr %s222, 8
        %s224 = scalar_lea.vmem %s0, %s223
      $region36: #{feed_forward.1} parent=31 // pred_fallthru
        _
    $region32: #{feed_forward.1} parent=5 // pred_fallthru
      _
    %p225 = scmp.le.s32.totalorder 1, %s11
    %p226 = scmp.lt.s32.totalorder %s11, 3
    %p227 = pnand %p225, %p226
    %p228 = pneg %p227
    // Predicated region
    $region37: #{feed_forward.1} parent=5 // pred_check
      _
    $region38: #{feed_forward.1} parent=5 // pred_check_branch
      %230 = sbr.rel (%p227) target = $region40
    $region39: #{feed_forward.1} parent=5 // pred_region
      %s231 = ssub.s32 %s11, 1
      %p232 = scmp.lt.s32.totalorder %s20, 1
      %s233 = scalar_select %p232, %s20, 1
      %s234 = smul.addr %s233, 8
      %s235 = scalar_lea.vmem %s0, %s234
      %p236 = pneg %p49
      %p237 = pneg %p46
      %p238 = scmp.lt.s32.totalorder %s21, 0
      %s239 = scalar_select %p238, %s21, 0
      %s240 = smul.addr %s239, 8
      %s241 = scalar_lea.vmem %s1, %s240
      %p242 = pneg %p75
      %p243 = pneg %p72
      %p244 = scmp.lt.s32.totalorder %s21, 0
      %s245 = scalar_select %p244, %s21, 0
      %s246 = scalar_lea.vmem %s2, %s245
      %p247 = pneg %p101
      %p248 = pneg %p98
      %s249 = smul.u32 16, %s21
      %p250 = scmp.lt.s32.totalorder %s249, 15
      %s251 = scalar_select %p250, %s249, 15
      %s252 = smul.addr %s251, 8
      %s253 = scalar_lea.vmem %s3, %s252
      %p254 = pneg %p127
      %p255 = pneg %p124
      %p256 = pneg %p148
      %p257 = pneg %p145
      %p258 = pneg %p174
      %p259 = pneg %p171
      %p260 = scmp.lt.s32.totalorder %s20, 1
      %s261 = scalar_select %p260, %s20, 1
      %s262 = smul.addr %s261, 8
      %s263 = scalar_lea.vmem %s5, %s262
      %p264 = scmp.lt.s32.totalorder %s20, 1
      %s265 = scalar_select %p264, %s20, 1
      %s266 = smul.addr %s265, 8
      %s267 = scalar_lea.vmem %s0, %s266
      %p268 = scmp.lt.s32.totalorder %s21, 0
      %s269 = scalar_select %p268, %s21, 0
      %s270 = smul.addr %s269, 8
      %s271 = scalar_lea.vmem %s1, %s270
      %p272 = scmp.lt.s32.totalorder %s21, 0
      %s273 = scalar_select %p272, %s21, 0
      %s274 = scalar_lea.vmem %s2, %s273
      %s275 = smul.u32 16, %s21
      %p276 = scmp.lt.s32.totalorder %s275, 15
      %s277 = scalar_select %p276, %s275, 15
      %s278 = smul.addr %s277, 8
      %s279 = scalar_lea.vmem %s3, %s278
      %s280 = smul.u32 16, %s21
      %p281 = scmp.lt.s32.totalorder %s20, 1
      %s282 = scalar_select %p281, %s20, 1
      %s283 = smul.addr %s282, 8
      %s284 = scalar_lea.vmem %s5, %s283
      %p285 = scmp.eq.s32.totalorder %s21, 0
      // Predicated region
      $region41: #{feed_forward.1} parent=39 // pred_check
        %p286 = pneg %p285
      $region42: #{feed_forward.1} parent=39 // pred_check_branch
        %288 = sbr.rel (%p286) target = $region44
      $region43: #{feed_forward.1} parent=39 // pred_region
        %289 = vst [vmem:[#allocation2] sm:$0xff] 0.0
      $region44: #{feed_forward.1} parent=39 // pred_fallthru
        _
      %v290 = vld [vmem:[%s267] sm:$0xff]
      %v291 = vld [vmem:[%s271] sm:$0xff]
      %v292 = vld [vmem:[%s271 + $0x8] sm:$0xff]
      %v293 = vld [vmem:[%s271 + $0x10] sm:$0xff]
      %v294 = vld [vmem:[%s271 + $0x18] sm:$0xff]
      %v295 = vld [vmem:[%s271 + $0x20] sm:$0xff]
      %v296 = vld [vmem:[%s271 + $0x28] sm:$0xff]
      %v297 = vld [vmem:[%s271 + $0x30] sm:$0xff]
      %v298 = vld [vmem:[%s271 + $0x38] sm:$0xff]
      %v299 = vld [vmem:[%s271 + $0x40] sm:$0xff]
      %v300 = vld [vmem:[%s271 + $0x48] sm:$0xff]
      %v301 = vld [vmem:[%s271 + $0x50] sm:$0xff]
      %v302 = vld [vmem:[%s271 + $0x58] sm:$0xff]
      %v303 = vld [vmem:[%s271 + $0x60] sm:$0xff]
      %v304 = vld [vmem:[%s271 + $0x68] sm:$0xff]
      %v305 = vld [vmem:[%s271 + $0x70] sm:$0xff]
      %v306 = vld [vmem:[%s271 + $0x78] sm:$0xff]
      %v307 = vld [vmem:[%s274] sm:$0x1]
      %v309 = vlaneseq
      %v310 = vshrl.u32 %v309, 7
      %v311 = vsub.s32 0, %v310
      %v312 = vrot.slane %v307, %v311
      %314 = vmatprep.subr.mxu0 0.0
      %315 = vmatpush1.msra.mxu0 %v291
      %316 = vmatprep.subr.mxu0 0.0
      %317 = vmatpush1.msra.mxu0 %v292
      %318 = vmatprep.subr.mxu0 0.0
      %319 = vmatpush1.msra.mxu0 %v293
      %320 = vmatprep.subr.mxu0 0.0
      %321 = vmatpush1.msra.mxu0 %v294
      %322 = vmatprep.subr.mxu0 0.0
      %323 = vmatpush1.msra.mxu0 %v295
      %324 = vmatprep.subr.mxu0 0.0
      %325 = vmatpush1.msra.mxu0 %v296
      %326 = vmatprep.subr.mxu0 0.0
      %327 = vmatpush1.msra.mxu0 %v297
      %328 = vmatprep.subr.mxu0 0.0
      %329 = vmatpush1.msra.mxu0 %v298
      %330 = vmatprep.subr.mxu0 0.0
      %331 = vmatpush1.msra.mxu0 %v299
      %332 = vmatprep.subr.mxu0 0.0
      %333 = vmatpush1.msra.mxu0 %v300
      %334 = vmatprep.subr.mxu0 0.0
      %335 = vmatpush1.msra.mxu0 %v301
      %336 = vmatprep.subr.mxu0 0.0
      %337 = vmatpush1.msra.mxu0 %v302
      %338 = vmatprep.subr.mxu0 0.0
      %339 = vmatpush1.msra.mxu0 %v303
      %340 = vmatprep.subr.mxu0 0.0
      %341 = vmatpush1.msra.mxu0 %v304
      %342 = vmatprep.subr.mxu0 0.0
      %343 = vmatpush1.msra.mxu0 %v305
      %344 = vmatprep.subr.mxu0 0.0
      %345 = vmatpush1.msra.mxu0 %v306
      %346 = vmatprep.subr.mxu0 0.0
      %347 = vmatpush1.msra.mxu0 0.0
      %348 = vmatprep.subr.mxu0 0.0
      %349 = vmatpush1.msra.mxu0 0.0
      %350 = vmatprep.subr.mxu0 0.0
      %351 = vmatpush1.msra.mxu0 0.0
      %352 = vmatprep.subr.mxu0 0.0
      %353 = vmatpush1.msra.mxu0 0.0
      %354 = vmatprep.subr.mxu0 0.0
      %355 = vmatpush1.msra.mxu0 0.0
      %356 = vmatprep.subr.mxu0 0.0
      %357 = vmatpush1.msra.mxu0 0.0
      %358 = vmatprep.subr.mxu0 0.0
      %359 = vmatpush1.msra.mxu0 0.0
      %360 = vmatprep.subr.mxu0 0.0
      %361 = vmatpush1.msra.mxu0 0.0
      %362 = vmatprep.subr.mxu0 0.0
      %363 = vmatpush1.msra.mxu0 0.0
      %364 = vmatprep.subr.mxu0 0.0
      %365 = vmatpush1.msra.mxu0 0.0
      %366 = vmatprep.subr.mxu0 0.0
      %367 = vmatpush1.msra.mxu0 0.0
      %368 = vmatprep.subr.mxu0 0.0
      %369 = vmatpush1.msra.mxu0 0.0
      %370 = vmatprep.subr.mxu0 0.0
      %371 = vmatpush1.msra.mxu0 0.0
      %372 = vmatprep.subr.mxu0 0.0
      %373 = vmatpush1.msra.mxu0 0.0
      %374 = vmatprep.subr.mxu0 0.0
      %375 = vmatpush1.msra.mxu0 0.0
      %376 = vmatprep.subr.mxu0 0.0
      %377 = vmatpush1.msra.mxu0 0.0
      %378 = vmatprep.mubr.f32.mxu0 0.0
      %379 = vmatmul.mubr.f32.gmra.mrb[0].mxu0 %v290
      %v380 = vpop.f32.mrb[0].mxu0
      %v381 = vadd.f32 %v312, %v380
      %v382 = vpop.f32.mrb[0].mxu0
      %383 = vdwg.mxu0
      %v384 = vmax.f32 %v381, 0.0
      %v385 = vld [vmem:[#allocation2] sm:$0xff]
      %v386 = vld [vmem:[%s279] sm:$0xff]
      %v387 = vld [vmem:[%s279 + $0x8] sm:$0xff]
      %v388 = vld [vmem:[%s279 + $0x10] sm:$0xff]
      %v389 = vld [vmem:[%s279 + $0x18] sm:$0xff]
      %v390 = vld [vmem:[%s279 + $0x20] sm:$0xff]
      %v391 = vld [vmem:[%s279 + $0x28] sm:$0xff]
      %v392 = vld [vmem:[%s279 + $0x30] sm:$0xff]
      %v393 = vld [vmem:[%s279 + $0x38] sm:$0xff]
      %v394 = vld [vmem:[%s279 + $0x40] sm:$0xff]
      %v395 = vld [vmem:[%s279 + $0x48] sm:$0xff]
      %v396 = vld [vmem:[%s279 + $0x50] sm:$0xff]
      %v397 = vld [vmem:[%s279 + $0x58] sm:$0xff]
      %v398 = vld [vmem:[%s279 + $0x60] sm:$0xff]
      %v399 = vld [vmem:[%s279 + $0x68] sm:$0xff]
      %v400 = vld [vmem:[%s279 + $0x70] sm:$0xff]
      %v401 = vld [vmem:[%s279 + $0x78] sm:$0xff]
      %402 = vmatprep.subr.mxu0 0.0
      %403 = vmatpush1.msra.mxu0 %v386
      %404 = vmatprep.subr.mxu0 0.0
      %405 = vmatpush1.msra.mxu0 %v387
      %406 = vmatprep.subr.mxu0 0.0
      %407 = vmatpush1.msra.mxu0 %v388
      %408 = vmatprep.subr.mxu0 0.0
      %409 = vmatpush1.msra.mxu0 %v389
      %410 = vmatprep.subr.mxu0 0.0
      %411 = vmatpush1.msra.mxu0 %v390
      %412 = vmatprep.subr.mxu0 0.0
      %413 = vmatpush1.msra.mxu0 %v391
      %414 = vmatprep.subr.mxu0 0.0
      %415 = vmatpush1.msra.mxu0 %v392
      %416 = vmatprep.subr.mxu0 0.0
      %417 = vmatpush1.msra.mxu0 %v393
      %418 = vmatprep.subr.mxu0 0.0
      %419 = vmatpush1.msra.mxu0 %v394
      %420 = vmatprep.subr.mxu0 0.0
      %421 = vmatpush1.msra.mxu0 %v395
      %422 = vmatprep.subr.mxu0 0.0
      %423 = vmatpush1.msra.mxu0 %v396
      %424 = vmatprep.subr.mxu0 0.0
      %425 = vmatpush1.msra.mxu0 %v397
      %426 = vmatprep.subr.mxu0 0.0
      %427 = vmatpush1.msra.mxu0 %v398
      %428 = vmatprep.subr.mxu0 0.0
      %429 = vmatpush1.msra.mxu0 %v399
      %430 = vmatprep.subr.mxu0 0.0
      %431 = vmatpush1.msra.mxu0 %v400
      %432 = vmatprep.subr.mxu0 0.0
      %433 = vmatpush1.msra.mxu0 %v401
      %434 = vmatprep.subr.mxu0 0.0
      %435 = vmatpush1.msra.mxu0 0.0
      %436 = vmatprep.subr.mxu0 0.0
      %437 = vmatpush1.msra.mxu0 0.0
      %438 = vmatprep.subr.mxu0 0.0
      %439 = vmatpush1.msra.mxu0 0.0
      %440 = vmatprep.subr.mxu0 0.0
      %441 = vmatpush1.msra.mxu0 0.0
      %442 = vmatprep.subr.mxu0 0.0
      %443 = vmatpush1.msra.mxu0 0.0
      %444 = vmatprep.subr.mxu0 0.0
      %445 = vmatpush1.msra.mxu0 0.0
      %446 = vmatprep.subr.mxu0 0.0
      %447 = vmatpush1.msra.mxu0 0.0
      %448 = vmatprep.subr.mxu0 0.0
      %449 = vmatpush1.msra.mxu0 0.0
      %450 = vmatprep.subr.mxu0 0.0
      %451 = vmatpush1.msra.mxu0 0.0
      %452 = vmatprep.subr.mxu0 0.0
      %453 = vmatpush1.msra.mxu0 0.0
      %454 = vmatprep.subr.mxu0 0.0
      %455 = vmatpush1.msra.mxu0 0.0
      %456 = vmatprep.subr.mxu0 0.0
      %457 = vmatpush1.msra.mxu0 0.0
      %458 = vmatprep.subr.mxu0 0.0
      %459 = vmatpush1.msra.mxu0 0.0
      %460 = vmatprep.subr.mxu0 0.0
      %461 = vmatpush1.msra.mxu0 0.0
      %462 = vmatprep.subr.mxu0 0.0
      %463 = vmatpush1.msra.mxu0 0.0
      %464 = vmatprep.subr.mxu0 0.0
      %465 = vmatpush1.msra.mxu0 0.0
      %466 = vmatprep.mubr.f32.mxu0 0.0
      %467 = vmatmul.mubr.f32.gmra.mrb[0].mxu0 %v384
      %v468 = vpop.f32.mrb[0].mxu0
      %v469 = vadd.f32 0.0, %v468
      %v470 = vpop.f32.mrb[0].mxu0
      %471 = vdwg.mxu0
      %v472 = vadd.f32 %v385, %v469
      %473 = vst [vmem:[#allocation2] sm:$0xff] %v472
      // Predicated region
      $region45: #{feed_forward.1} parent=39 // pred_check
        %p474 = pneg %p285
      $region46: #{feed_forward.1} parent=39 // pred_check_branch
        %476 = sbr.rel (%p474) target = $region48
      $region47: #{feed_forward.1} parent=39 // pred_region
        %v477 = vld [vmem:[#allocation2] sm:$0xff]
        %v478 = vld [vmem:[%s4] sm:$0x1]
        %v480 = vlaneseq
        %v481 = vshrl.u32 %v480, 7
        %v482 = vsub.s32 0, %v481
        %v483 = vrot.slane %v478, %v482
        %v485 = vadd.f32 %v477, %v483
        %486 = vst [vmem:[%s284] sm:$0xff] %v485
      $region48: #{feed_forward.1} parent=39 // pred_fallthru
        _
      %p487 = scmp.lt.s32.totalorder %s20, 1
      %s488 = scalar_select %p487, %s20, 1
      %s489 = smul.addr %s488, 8
      %s490 = scalar_lea.vmem %s5, %s489
      // Predicated region
      $region49: #{feed_forward.1} parent=39 // pred_check
        %p491 = pneg %p171
      $region50: #{feed_forward.1} parent=39 // pred_check_branch
        %493 = sbr.rel (%p491) target = $region52
      $region51: #{feed_forward.1} parent=39 // pred_region
        _
      $region52: #{feed_forward.1} parent=39 // pred_fallthru
        _
    $region40: #{feed_forward.1} parent=5 // pred_fallthru
      _
    %p494 = scmp.le.s32.totalorder 2, %s11
    // Predicated region
    $region53: #{feed_forward.1} parent=5 // pred_check
      %p495 = pneg %p494
    $region54: #{feed_forward.1} parent=5 // pred_check_branch
      %497 = sbr.rel (%p495) target = $region56
    $region55: #{feed_forward.1} parent=5 // pred_region
      %s498 = ssub.s32 %s11, 2
      // Predicated region
      $region57: #{feed_forward.1} parent=55 // pred_check
        %p499 = pneg %p177
      $region58: #{feed_forward.1} parent=55 // pred_check_branch
        %501 = sbr.rel (%p499) target = $region60
      $region59: #{feed_forward.1} parent=55 // pred_region
        %p502 = scmp.lt.s32.totalorder %s22, 1
        %s503 = scalar_select %p502, %s22, 1
        %s504 = smul.addr %s503, 8
        %s505 = scalar_lea.vmem %s5, %s504
      $region60: #{feed_forward.1} parent=55 // pred_fallthru
        _
    $region56: #{feed_forward.1} parent=5 // pred_fallthru
      _
  $region6: #{feed_forward.1} parent=0 // loop_footer
    %s15 = sadd.s32 1, %s11
  $region7: #{feed_forward.1} parent=0 // loop_footer_branch
    %10 = sbr.rel target = $region3
  $region8: #{feed_forward.1} parent=0 // loop_exit
    _

</llo_original>
